<compile_context>
chip_gen: v7x
topology: tpu7x:2x2x1
jax: 0.10.0
libtpu: 0.0.40
codegen_flags: <defaults>
</compile_context>

<pallas_src>
import jax
import jax.numpy as jnp
from jax.experimental import pallas as pl
from jax.experimental.pallas import tpu as pltpu


def _identity_kernel(x_ref, o_ref):
    # Pure pass-through: the abstract Encoder defines no transformation.
    o_ref[...] = x_ref[...]


def _round_up(x, m):
    return ((x + m - 1) // m) * m


_LANE = 128
_MAX_TILE_COLS = 8192        # lane-axis cap (large multiple of 128)
_MAX_FLAT_LANE_WIDTH = 4096  # lane width cap for the flattened slab view


def _block_budget():
    """Per-block VMEM budget (bytes) and optional vmem_limit_bytes per chip."""
    vmem_capacity = None
    try:
        vmem_capacity = int(pltpu.get_tpu_info().vmem_capacity_bytes)
    except Exception:
        vmem_capacity = None
    if vmem_capacity is not None and vmem_capacity <= 64 * 1024 * 1024:
        # v7x-class (64 MiB physical VMEM, ~3.2 TB/s HBM): large blocks so the
        # ~0.35 us per-grid-step overhead amortizes. 2 in + 2 out double
        # buffers = 32 MiB, comfortably under a raised 48 MiB scoped limit.
        return 8 * 1024 * 1024, 48 * 1024 * 1024
    # v5e / v6e (128 MiB physical VMEM). 3 MiB blocks keep the double-buffered
    # footprint (4 x 3 MiB = 12 MiB) under the v5e 16 MiB scoped-VMEM default;
    # on v6e the per-step overhead is already a few percent at this size.
    return 3 * 1024 * 1024, None


def _choose_2d_view(x):
    """Pick a lane-dense 2D view of x. Reshapes only; never pads or copies."""
    total = x.size
    # Prefer a fully lane-dense flattened slab (total % L == 0, L a multiple
    # of 128): zero padding bytes on either the read or the write stream.
    lane_cap = min(_MAX_FLAT_LANE_WIDTH, (total // _LANE) * _LANE)
    for cand in range(lane_cap, _LANE - 1, -_LANE):
        if total % cand == 0:
            return x.reshape(total // cand, cand)
    # Fallback: natural (N*C, H*W) view; partial edge blocks are masked.
    n, c, h, w = x.shape
    return x.reshape(n * c, h * w)


@jax.jit
def encoder_forward(x):
    """Identity forward matching the (abstract) Encoder interface.

    x: [N, C, H, W] array (any dtype). Returns an array with identical shape,
    dtype and values via a single tiled out-of-place HBM->VMEM->HBM copy.
    """
    orig_shape = x.shape
    itemsize = jnp.dtype(x.dtype).itemsize
    # Sublane packing multiple per dtype (f32:8, bf16:16, int8/fp8:32).
    sublane_mult = {4: 8, 2: 16, 1: 32}.get(itemsize, 8)

    block_bytes, vmem_limit = _block_budget()
    block_elems = max(block_bytes // itemsize, sublane_mult * _LANE)

    x2d = _choose_2d_view(x)
    rows, cols = x2d.shape

    # Lane-axis tile: full width when it fits (single block column, unmasked
    # stores); otherwise a large multiple of 128 with masked edge blocks.
    cols_padded = _round_up(cols, _LANE)
    if cols_padded <= _MAX_TILE_COLS and cols_padded * sublane_mult <= block_elems:
        tile_cols = cols  # full dim — always a legal block dim
    else:
        tile_cols = min(
            _MAX_TILE_COLS,
            max((block_elems // sublane_mult) // _LANE, 1) * _LANE,
        )

    # Row-axis tile from the remaining VMEM budget.
    tile_cols_padded = _round_up(tile_cols, _LANE)
    rows_budget = max(block_elems // tile_cols_padded, sublane_mult)
    rows_budget = (rows_budget // sublane_mult) * sublane_mult
    tile_rows = rows if rows <= rows_budget else rows_budget

    # If everything collapsed into one block, split the lane axis in two so
    # both TensorCores on a v7x megacore get work (harmless elsewhere).
    if tile_rows >= rows and tile_cols >= cols and cols % (2 * _LANE) == 0:
        tile_cols = cols // 2

    grid = (pl.cdiv(rows, tile_rows), pl.cdiv(cols, tile_cols))

    compiler_kwargs = dict(dimension_semantics=("parallel", "parallel"))
    if vmem_limit is not None:
        compiler_kwargs["vmem_limit_bytes"] = vmem_limit

    out2d = pl.pallas_call(
        _identity_kernel,
        out_shape=jax.ShapeDtypeStruct((rows, cols), x2d.dtype),
        grid_spec=pltpu.PrefetchScalarGridSpec(
            num_scalar_prefetch=0,
            grid=grid,
            in_specs=[pl.BlockSpec((tile_rows, tile_cols), lambda i, j: (i, j))],
            out_specs=pl.BlockSpec((tile_rows, tile_cols), lambda i, j: (i, j)),
        ),
        compiler_params=pltpu.CompilerParams(**compiler_kwargs),
        cost_estimate=pl.CostEstimate(
            flops=0,
            transcendentals=0,
            bytes_accessed=2 * rows * cols * itemsize,
        ),
    )(x2d)

    return out2d.reshape(orig_shape)


if __name__ == "__main__":
    key = jax.random.PRNGKey(0)
    k0, k1 = jax.random.split(key)

    # Small NCHW input consistent with an encoder-style module.
    x = jax.random.normal(k0, (2, 4, 16, 16), dtype=jnp.float32)
    y = jax.block_until_ready(encoder_forward(x))
    assert y.shape == x.shape and y.dtype == x.dtype
    assert bool(jnp.allclose(y, x))

    # Ragged spatial size (14*14 = 196, not a multiple of 128) exercises the
    # no-pad, full-dim-block fallback path.
    x2 = jax.random.normal(k1, (2, 4, 14, 14), dtype=jnp.float32)
    y2 = jax.block_until_ready(encoder_forward(x2))
    assert y2.shape == x2.shape and bool(jnp.allclose(y2, x2))

    print("KERNEL_OK")
</pallas_src>

<mosaic_0001>
module attributes {stable_mosaic.version = 11 : i64} {
  func.func @_identity_kernel(%arg0: i32, %arg1: i32, %arg2: memref<1x1024xf32, #tpu.memory_space<vmem>>, %arg3: memref<1x1024xf32, #tpu.memory_space<vmem>>) attributes {dimension_semantics = [#tpu.dimension_semantics<parallel>, #tpu.dimension_semantics<parallel>], iteration_bounds = array<i64: 1, 2>, scalar_prefetch = 0 : i64, scratch_operands = 0 : i64, tpu.core_type = #tpu.core_type<tc>, window_params = [{transform_indices = @transform_0, window_bounds = array<i64: 1, 1024>}, {transform_indices = @transform_1, window_bounds = array<i64: 1, 1024>}]} {
    %c0 = arith.constant 0 : index
    %c0_0 = arith.constant 0 : index
    %0 = vector.load %arg2[%c0, %c0_0] : memref<1x1024xf32, #tpu.memory_space<vmem>>, vector<1x1024xf32>
    %c0_1 = arith.constant 0 : index
    %c0_2 = arith.constant 0 : index
    %1 = vector.load %arg3[%c0_1, %c0_2] : memref<1x1024xf32, #tpu.memory_space<vmem>>, vector<1x1024xf32>
    tpu.vector_store %arg3[%c0_1, %c0_2], %0 {strides = array<i32>} : memref<1x1024xf32, #tpu.memory_space<vmem>>, vector<1x1024xf32>,
    return
  }
  func.func @transform_0(%arg0: i32, %arg1: i32) -> (i32, i32) {
    %c0_i32 = arith.constant 0 : i32
    return %arg0, %arg1 : i32, i32
  }
  func.func @transform_1(%arg0: i32, %arg1: i32) -> (i32, i32) {
    %c0_i32 = arith.constant 0 : i32
    return %arg0, %arg1 : i32, i32
  }
}

</mosaic_0001>

<llo_original>
// kernel: encoder_forward.1
$region0: #{encoder_forward.1}
  #allocation0 [shape = 'u32[]', space=smem, size = 0x4, offset = 0x4, fixed_abs, tag = 'smem constant byte address 0x4 - core index']
  #allocation1 [shape = 'u32[144,128]{1,0:T(1,128)}', space=vmem, size = 0x12000, scoped, tag = 'internal scratch']
  %s0 = inlined_call_operand.vmem [shape: f32[1,2048], index: 0, kind: input, shape index: {}]
  %s1 = inlined_call_operand.vmem [shape: f32[1,2048], index: 1, kind: output, shape index: {}]
  %s2 = sld [smem:[#allocation0]]
  $region37: #{encoder_forward.1} parent=0
    _
  %s4 = ssub.s32 1, %s2
  %s5 = scalar_select 0, %s4, %s2
  loop: start=0, step=1, limit=4
  $region2: #{encoder_forward.1} parent=0 // loop_pre_header
    _
  $region3: #{encoder_forward.1} parent=0 // loop_header
    %s7 = sphi 0, %s11
    %p8 = scmp.ge.s32.totalorder %s7, 4
    %s14 = sphi 0, %s26
    %s15 = sphi 0, %s22
    %s16 = sphi 0, %s14
    %s17 = sphi 0, %s15
    %s18 = sphi 0, %s16
    %s19 = sphi 0, %s17
    %s31 = sphi 0, %s33
    %s34 = sphi 0, %s31
    %s35 = sphi 0, %s34
    %s51 = sphi 0, %s35
    %s59 = sphi 0, %s61
    %s62 = sphi 0, %s59
    %s63 = sphi 0, %s62
    %s79 = sphi 0, %s63
  $region4: #{encoder_forward.1} parent=0 // loop_header_branch
    %10 = sbr.rel (%p8) target = $region8
  $region5: #{encoder_forward.1} parent=0 // loop_body
    %s12 = ssub.s32 %s7, 1
    %s13 = ssub.s32 %s7, 2
    %s20 = sadd.s32 1, %s15
    %p21 = scmp.ge.s32.totalorder %s20, 2
    %s22 = scalar_select %p21, 0, %s20
    %s23 = sadd.s32 1, %s14
    %s24 = scalar_select %p21, %s23, %s14
    %p25 = scmp.ge.s32.totalorder %s24, 1
    %s26 = scalar_select %p25, 0, %s24
    %s27 = ssub.s32 %s14, %s26
    %s28 = ssub.s32 %s15, %s22
    %s29 = sor.u32 %s27, %s28
    %p30 = scmp.eq.s32.totalorder %s29, 0
    %s32 = sadd.s32 %s31, 1
    %s33 = scalar_select %p30, %s31, %s32
    %p36 = pneg %p30
    %p37 = scmp.eq.s32.totalorder %s7, 1
    %p38 = por %p36, %p37
    %p39 = scmp.ne.s32.totalorder %s31, %s34
    %p40 = scmp.eq.s32.totalorder %s7, 0
    %p41 = por %p39, %p40
    %p42 = scmp.ne.s32.totalorder %s31, %s34
    %p43 = scmp.eq.s32.totalorder %s12, 1
    %p44 = por %p42, %p43
    %p45 = scmp.ne.s32.totalorder %s34, %s35
    %p46 = scmp.eq.s32.totalorder %s12, 0
    %p47 = por %p45, %p46
    %p48 = scmp.ne.s32.totalorder %s34, %s35
    %p49 = scmp.eq.s32.totalorder %s13, 1
    %p50 = por %p48, %p49
    %p52 = scmp.ne.s32.totalorder %s35, %s51
    %p53 = scmp.eq.s32.totalorder %s13, 0
    %p54 = por %p52, %p53
    %s55 = ssub.s32 %s14, %s26
    %s56 = ssub.s32 %s15, %s22
    %s57 = sor.u32 %s55, %s56
    %p58 = scmp.eq.s32.totalorder %s57, 0
    %s60 = sadd.s32 %s59, 1
    %s61 = scalar_select %p58, %s59, %s60
    %p64 = pneg %p58
    %p65 = scmp.eq.s32.totalorder %s7, 1
    %p66 = por %p64, %p65
    %p67 = scmp.ne.s32.totalorder %s59, %s62
    %p68 = scmp.eq.s32.totalorder %s7, 0
    %p69 = por %p67, %p68
    %p70 = scmp.ne.s32.totalorder %s59, %s62
    %p71 = scmp.eq.s32.totalorder %s12, 1
    %p72 = por %p70, %p71
    %p73 = scmp.ne.s32.totalorder %s62, %s63
    %p74 = scmp.eq.s32.totalorder %s12, 0
    %p75 = por %p73, %p74
    %p76 = scmp.ne.s32.totalorder %s62, %s63
    %p77 = scmp.eq.s32.totalorder %s13, 1
    %p78 = por %p76, %p77
    %p80 = scmp.ne.s32.totalorder %s63, %s79
    %p81 = scmp.eq.s32.totalorder %s13, 0
    %p82 = por %p80, %p81
    %p83 = scmp.le.s32.totalorder 1, %s7
    %p84 = scmp.lt.s32.totalorder %s7, 3
    %p85 = pnand %p83, %p84
    %p86 = pneg %p85
    // Predicated region
    $region9: #{encoder_forward.1} parent=5 // pred_check
      _
    $region10: #{encoder_forward.1} parent=5 // pred_check_branch
      %88 = sbr.rel (%p85) target = $region12
    $region11: #{encoder_forward.1} parent=5 // pred_region
      %s89 = ssub.s32 %s7, 1
    $region12: #{encoder_forward.1} parent=5 // pred_fallthru
      _
    %p90 = scmp.lt.s32.totalorder %s7, 2
    // Predicated region
    $region13: #{encoder_forward.1} parent=5 // pred_check
      %p91 = pneg %p90
    $region14: #{encoder_forward.1} parent=5 // pred_check_branch
      %93 = sbr.rel (%p91) target = $region16
    $region15: #{encoder_forward.1} parent=5 // pred_region
      // Predicated region
      $region17: #{encoder_forward.1} parent=15 // pred_check
        %p94 = pneg %p41
      $region18: #{encoder_forward.1} parent=15 // pred_check_branch
        %96 = sbr.rel (%p94) target = $region20
      $region19: #{encoder_forward.1} parent=15 // pred_region
        %s97 = smul.u32 8, %s15
        %p98 = scmp.lt.s32.totalorder %s14, 0
        %s99 = scalar_select %p98, %s14, 0
        %p100 = scmp.lt.s32.totalorder %s97, 15
        %s101 = scalar_select %p100, %s97, 15
        %s102 = smul.addr %s99, 16
        %s103 = sadd.s32 %s101, %s102
        %s104 = scalar_lea.vmem %s0, %s103
        %s105 = smul.u32 8, %s15
      $region20: #{encoder_forward.1} parent=15 // pred_fallthru
        _
    $region16: #{encoder_forward.1} parent=5 // pred_fallthru
      _
    %p106 = scmp.le.s32.totalorder 1, %s7
    %p107 = scmp.lt.s32.totalorder %s7, 3
    %p108 = pnand %p106, %p107
    %p109 = pneg %p108
    // Predicated region
    $region21: #{encoder_forward.1} parent=5 // pred_check
      _
    $region22: #{encoder_forward.1} parent=5 // pred_check_branch
      %111 = sbr.rel (%p108) target = $region24
    $region23: #{encoder_forward.1} parent=5 // pred_region
      %s112 = ssub.s32 %s7, 1
      %s113 = smul.u32 8, %s17
      %p114 = scmp.lt.s32.totalorder %s16, 0
      %s115 = scalar_select %p114, %s16, 0
      %p116 = scmp.lt.s32.totalorder %s113, 15
      %s117 = scalar_select %p116, %s113, 15
      %s118 = smul.addr %s115, 16
      %s119 = sadd.s32 %s117, %s118
      %s120 = scalar_lea.vmem %s0, %s119
      %p121 = pneg %p47
      %p122 = pneg %p44
      %p123 = pneg %p75
      %p124 = pneg %p72
      %s125 = smul.u32 8, %s17
      %p126 = scmp.lt.s32.totalorder %s16, 0
      %s127 = scalar_select %p126, %s16, 0
      %p128 = scmp.lt.s32.totalorder %s125, 15
      %s129 = scalar_select %p128, %s125, 15
      %s130 = smul.addr %s127, 16
      %s131 = sadd.s32 %s129, %s130
      %s132 = scalar_lea.vmem %s1, %s131
      %s133 = smul.u32 8, %s17
      %p134 = scmp.lt.s32.totalorder %s16, 0
      %s135 = scalar_select %p134, %s16, 0
      %p136 = scmp.lt.s32.totalorder %s133, 15
      %s137 = scalar_select %p136, %s133, 15
      %s138 = smul.addr %s135, 16
      %s139 = sadd.s32 %s137, %s138
      %s140 = scalar_lea.vmem %s0, %s139
      %s141 = smul.u32 8, %s17
      %s142 = smul.u32 8, %s17
      %p143 = scmp.lt.s32.totalorder %s16, 0
      %s144 = scalar_select %p143, %s16, 0
      %p145 = scmp.lt.s32.totalorder %s142, 15
      %s146 = scalar_select %p145, %s142, 15
      %s147 = smul.addr %s144, 16
      %s148 = sadd.s32 %s146, %s147
      %s149 = scalar_lea.vmem %s1, %s148
      %s150 = smul.u32 8, %s17
      %v151 = vld [vmem:[%s140] sm:$0xff]
      %152 = vst [vmem:[%s149] sm:$0xff] %v151
      %s153 = smul.u32 8, %s17
      %p154 = scmp.lt.s32.totalorder %s16, 0
      %s155 = scalar_select %p154, %s16, 0
      %p156 = scmp.lt.s32.totalorder %s153, 15
      %s157 = scalar_select %p156, %s153, 15
      %s158 = smul.addr %s155, 16
      %s159 = sadd.s32 %s157, %s158
      %s160 = scalar_lea.vmem %s1, %s159
      // Predicated region
      $region25: #{encoder_forward.1} parent=23 // pred_check
        %p161 = pneg %p72
      $region26: #{encoder_forward.1} parent=23 // pred_check_branch
        %163 = sbr.rel (%p161) target = $region28
      $region27: #{encoder_forward.1} parent=23 // pred_region
        %s164 = smul.u32 8, %s17
      $region28: #{encoder_forward.1} parent=23 // pred_fallthru
        _
    $region24: #{encoder_forward.1} parent=5 // pred_fallthru
      _
    %p165 = scmp.le.s32.totalorder 2, %s7
    // Predicated region
    $region29: #{encoder_forward.1} parent=5 // pred_check
      %p166 = pneg %p165
    $region30: #{encoder_forward.1} parent=5 // pred_check_branch
      %168 = sbr.rel (%p166) target = $region32
    $region31: #{encoder_forward.1} parent=5 // pred_region
      %s169 = ssub.s32 %s7, 2
      // Predicated region
      $region33: #{encoder_forward.1} parent=31 // pred_check
        %p170 = pneg %p78
      $region34: #{encoder_forward.1} parent=31 // pred_check_branch
        %172 = sbr.rel (%p170) target = $region36
      $region35: #{encoder_forward.1} parent=31 // pred_region
        %s173 = smul.u32 8, %s19
        %p174 = scmp.lt.s32.totalorder %s18, 0
        %s175 = scalar_select %p174, %s18, 0
        %p176 = scmp.lt.s32.totalorder %s173, 15
        %s177 = scalar_select %p176, %s173, 15
        %s178 = smul.addr %s175, 16
        %s179 = sadd.s32 %s177, %s178
        %s180 = scalar_lea.vmem %s1, %s179
      $region36: #{encoder_forward.1} parent=31 // pred_fallthru
        _
    $region32: #{encoder_forward.1} parent=5 // pred_fallthru
      _
  $region6: #{encoder_forward.1} parent=0 // loop_footer
    %s11 = sadd.s32 1, %s7
  $region7: #{encoder_forward.1} parent=0 // loop_footer_branch
    %6 = sbr.rel target = $region3
  $region8: #{encoder_forward.1} parent=0 // loop_exit
    _

</llo_original>
